<compile_context>
chip_gen: v7x
topology: tpu7x:2x2x1
jax: 0.10.0
libtpu: 0.0.40
codegen_flags: <defaults>
</compile_context>

<pallas_src>
import math
import functools

import jax
import jax.numpy as jnp
from jax.experimental import pallas as pl
from jax.experimental.pallas import tpu as pltpu


def _round_up(x, m):
    return (x + m - 1) // m * m


def _gelu_exact(x):
    # PyTorch nn.GELU() default is the exact erf-based GELU (done in f32 here).
    # TODO(synk): optionally switch to tanh-approx GELU (EUP path) if the model
    # tolerates it; kept exact to match nn.GELU() semantics.
    return 0.5 * x * (1.0 + jax.lax.erf(x * (1.0 / math.sqrt(2.0))))


def mlp_head_kernel(x_ref, w1_ref, b1_ref, w2_ref, b2_ref, w3_ref, b3_ref, o_ref):
    cdt = w1_ref.dtype  # matmul operand dtype (bf16 or f32)

    # fc1 + GELU  (f32 accumulation on the MXU, bias/GELU in f32)
    h = jnp.dot(x_ref[...], w1_ref[...], preferred_element_type=jnp.float32)
    h = _gelu_exact(h + b1_ref[...])

    # fc2 + GELU
    h = jnp.dot(h.astype(cdt), w2_ref[...], preferred_element_type=jnp.float32)
    h = _gelu_exact(h + b2_ref[...])

    # fc3 (bias add fused into the output cast)
    y = jnp.dot(h.astype(cdt), w3_ref[...], preferred_element_type=jnp.float32)
    o_ref[...] = (y + b3_ref[...]).astype(o_ref.dtype)


@functools.partial(jax.jit, static_argnames=("block_b", "compute_dtype"))
def mlp_head(x, w1, b1, w2, b2, w3, b3, *, block_b=128, compute_dtype=jnp.bfloat16):
    """x: (B, in_features) -> (B, out_features)."""
    B, d_in = x.shape
    hidden = w1.shape[1]
    d_out = w3.shape[1]
    out_dtype = x.dtype
    cdt = jnp.dtype(compute_dtype)

    # Lane-dense padded sizes (multiples of 128) and padded batch.
    d_in_p = _round_up(d_in, 128)
    hid_p = _round_up(hidden, 128)
    d_out_p = _round_up(d_out, 128)
    Bp = _round_up(B, block_b)

    # Zero-padding preserves semantics exactly: padded input columns hit zero
    # weights, padded hidden units get 0 bias -> GELU(0)=0 -> contribute nothing,
    # padded output columns / batch rows are sliced off below.
    xp = jnp.pad(x, ((0, Bp - B), (0, d_in_p - d_in))).astype(cdt)
    w1p = jnp.pad(w1, ((0, d_in_p - d_in), (0, hid_p - hidden))).astype(cdt)
    w2p = jnp.pad(w2, ((0, hid_p - hidden), (0, hid_p - hidden))).astype(cdt)
    w3p = jnp.pad(w3, ((0, hid_p - hidden), (0, d_out_p - d_out))).astype(cdt)
    b1p = jnp.pad(b1.reshape(1, -1), ((0, 0), (0, hid_p - hidden))).astype(jnp.float32)
    b2p = jnp.pad(b2.reshape(1, -1), ((0, 0), (0, hid_p - hidden))).astype(jnp.float32)
    b3p = jnp.pad(b3.reshape(1, -1), ((0, 0), (0, d_out_p - d_out))).astype(jnp.float32)

    grid = (Bp // block_b,)

    in_specs = [
        pl.BlockSpec((block_b, d_in_p), lambda i: (i, 0)),   # x  : tiled over batch
        pl.BlockSpec((d_in_p, hid_p), lambda i: (0, 0)),     # w1 : resident
        pl.BlockSpec((1, hid_p), lambda i: (0, 0)),          # b1
        pl.BlockSpec((hid_p, hid_p), lambda i: (0, 0)),      # w2
        pl.BlockSpec((1, hid_p), lambda i: (0, 0)),          # b2
        pl.BlockSpec((hid_p, d_out_p), lambda i: (0, 0)),    # w3
        pl.BlockSpec((1, d_out_p), lambda i: (0, 0)),        # b3
    ]
    out_spec = pl.BlockSpec((block_b, d_out_p), lambda i: (i, 0))

    # Explicit VMEM budget: 2x buffers of (weights + biases + x/out tiles)
    # + the two f32 (block_b, hidden) intermediates that get spilled to VMEM.
    w_bytes = (d_in_p * hid_p + hid_p * hid_p + hid_p * d_out_p) * cdt.itemsize
    b_bytes = (2 * hid_p + d_out_p) * 4
    io_bytes = block_b * (d_in_p * cdt.itemsize + d_out_p * jnp.dtype(out_dtype).itemsize)
    scratch_bytes = 2 * block_b * hid_p * 4
    needed = 2 * (w_bytes + b_bytes + io_bytes) + scratch_bytes
    vmem_limit = min(max(int(1.25 * needed) + (4 << 20), 32 << 20), 64 << 20)

    out_p = pl.pallas_call(
        mlp_head_kernel,
        out_shape=jax.ShapeDtypeStruct((Bp, d_out_p), out_dtype),
        grid=grid,
        in_specs=in_specs,
        out_specs=out_spec,
        compiler_params=pltpu.CompilerParams(
            dimension_semantics=("parallel",),
            vmem_limit_bytes=vmem_limit,
        ),
    )(xp, w1p, b1p, w2p, b2p, w3p, b3p)

    return out_p[:B, :d_out]


def _trunc_normal(key, shape, std=0.02):
    # torch.nn.init.trunc_normal_(w, std=0.02): truncated standard normal in
    # [-2, 2] scaled by std.
    return jax.random.truncated_normal(key, -2.0, 2.0, shape, jnp.float32) * std


def init_mlp_head_params(key, in_features, hidden_features, out_features):
    k1, k2, k3 = jax.random.split(key, 3)
    # Stored as (in, out) = PyTorch weight.T
    w1 = _trunc_normal(k1, (in_features, hidden_features))
    w2 = _trunc_normal(k2, (hidden_features, hidden_features))
    w3 = _trunc_normal(k3, (hidden_features, out_features))
    b1 = jnp.zeros((hidden_features,), jnp.float32)
    b2 = jnp.zeros((hidden_features,), jnp.float32)
    b3 = jnp.zeros((out_features,), jnp.float32)
    return w1, b1, w2, b2, w3, b3


def _reference(x, w1, b1, w2, b2, w3, b3):
    h = jax.nn.gelu(x @ w1 + b1, approximate=False)
    h = jax.nn.gelu(h @ w2 + b2, approximate=False)
    return h @ w3 + b3


if __name__ == "__main__":
    in_features, hidden_features, out_features = 32, 64, 16
    batch = 8

    key = jax.random.PRNGKey(0)
    kx, kp = jax.random.split(key)
    x = jax.random.normal(kx, (batch, in_features), jnp.float32)
    params = init_mlp_head_params(kp, in_features, hidden_features, out_features)

    ref = _reference(x, *params)

    # f32 compute path: bit-accurate check against the reference.
    out_f32 = jax.block_until_ready(mlp_head(x, *params, compute_dtype=jnp.float32))
    assert out_f32.shape == (batch, out_features)
    assert jnp.allclose(out_f32, ref, atol=1e-5, rtol=1e-5), "f32 mismatch vs reference"

    # bf16 matmul path (default, fast on v6e/v7x): looser tolerance.
    out_bf16 = jax.block_until_ready(mlp_head(x, *params))
    assert out_bf16.shape == (batch, out_features)
    assert jnp.allclose(out_bf16, ref, atol=5e-3, rtol=5e-2), "bf16 mismatch vs reference"

    print("KERNEL_OK")
</pallas_src>

<mosaic_0001>
module attributes {stable_mosaic.version = 11 : i64} {
  func.func @mlp_head_kernel(%arg0: i32, %arg1: memref<128x128xf32, #tpu.memory_space<vmem>>, %arg2: memref<128x128xf32, #tpu.memory_space<vmem>>, %arg3: memref<1x128xf32, #tpu.memory_space<vmem>>, %arg4: memref<128x128xf32, #tpu.memory_space<vmem>>, %arg5: memref<1x128xf32, #tpu.memory_space<vmem>>, %arg6: memref<128x128xf32, #tpu.memory_space<vmem>>, %arg7: memref<1x128xf32, #tpu.memory_space<vmem>>, %arg8: memref<128x128xf32, #tpu.memory_space<vmem>>) attributes {dimension_semantics = [#tpu.dimension_semantics<parallel>], iteration_bounds = array<i64: 1>, scalar_prefetch = 0 : i64, scratch_operands = 0 : i64, tpu.core_type = #tpu.core_type<tc>, window_params = [{transform_indices = @transform_0, window_bounds = array<i64: 128, 128>}, {pipeline_mode = #tpu.pipeline_mode<synchronous>, transform_indices = @transform_1, window_bounds = array<i64: 128, 128>}, {pipeline_mode = #tpu.pipeline_mode<synchronous>, transform_indices = @transform_2, window_bounds = array<i64: 1, 128>}, {pipeline_mode = #tpu.pipeline_mode<synchronous>, transform_indices = @transform_3, window_bounds = array<i64: 128, 128>}, {pipeline_mode = #tpu.pipeline_mode<synchronous>, transform_indices = @transform_4, window_bounds = array<i64: 1, 128>}, {pipeline_mode = #tpu.pipeline_mode<synchronous>, transform_indices = @transform_5, window_bounds = array<i64: 128, 128>}, {pipeline_mode = #tpu.pipeline_mode<synchronous>, transform_indices = @transform_6, window_bounds = array<i64: 1, 128>}, {transform_indices = @transform_7, window_bounds = array<i64: 128, 128>}]} {
    %c0 = arith.constant 0 : index
    %c0_0 = arith.constant 0 : index
    %0 = vector.load %arg1[%c0, %c0_0] : memref<128x128xf32, #tpu.memory_space<vmem>>, vector<128x128xf32>
    %c0_1 = arith.constant 0 : index
    %c0_2 = arith.constant 0 : index
    %1 = vector.load %arg2[%c0_1, %c0_2] : memref<128x128xf32, #tpu.memory_space<vmem>>, vector<128x128xf32>
    %cst = arith.constant dense<0.000000e+00> : vector<128x128xf32>
    %2 = tpu.matmul %0, %1, %cst {dimension_numbers = #tpu.dot_dimension_numbers<[1], [0], [0], [1], [0, 0, 1, 1], [], []>} : vector<128x128xf32>, vector<128x128xf32>, vector<128x128xf32> -> vector<128x128xf32>
    %c0_3 = arith.constant 0 : index
    %c0_4 = arith.constant 0 : index
    %3 = vector.load %arg3[%c0_3, %c0_4] : memref<1x128xf32, #tpu.memory_space<vmem>>, vector<1x128xf32>
    %4 = vector.broadcast %3 : vector<1x128xf32> to vector<128x128xf32>
    %5 = arith.addf %2, %4 : vector<128x128xf32>
    %cst_5 = arith.constant 5.000000e-01 : f32
    %6 = vector.broadcast %cst_5 : f32 to vector<128x128xf32>
    %7 = arith.mulf %6, %5 : vector<128x128xf32>
    %cst_6 = arith.constant 0.707106769 : f32
    %8 = vector.broadcast %cst_6 : f32 to vector<128x128xf32>
    %9 = arith.mulf %5, %8 : vector<128x128xf32>
    %10 = math.erf %9 : vector<128x128xf32>
    %cst_7 = arith.constant 1.000000e+00 : f32
    %11 = vector.broadcast %cst_7 : f32 to vector<128x128xf32>
    %12 = arith.addf %11, %10 : vector<128x128xf32>
    %13 = arith.mulf %7, %12 : vector<128x128xf32>
    %c0_8 = arith.constant 0 : index
    %c0_9 = arith.constant 0 : index
    %14 = vector.load %arg4[%c0_8, %c0_9] : memref<128x128xf32, #tpu.memory_space<vmem>>, vector<128x128xf32>
    %cst_10 = arith.constant dense<0.000000e+00> : vector<128x128xf32>
    %15 = tpu.matmul %13, %14, %cst_10 {dimension_numbers = #tpu.dot_dimension_numbers<[1], [0], [0], [1], [0, 0, 1, 1], [], []>} : vector<128x128xf32>, vector<128x128xf32>, vector<128x128xf32> -> vector<128x128xf32>
    %c0_11 = arith.constant 0 : index
    %c0_12 = arith.constant 0 : index
    %16 = vector.load %arg5[%c0_11, %c0_12] : memref<1x128xf32, #tpu.memory_space<vmem>>, vector<1x128xf32>
    %17 = vector.broadcast %16 : vector<1x128xf32> to vector<128x128xf32>
    %18 = arith.addf %15, %17 : vector<128x128xf32>
    %cst_13 = arith.constant 5.000000e-01 : f32
    %19 = vector.broadcast %cst_13 : f32 to vector<128x128xf32>
    %20 = arith.mulf %19, %18 : vector<128x128xf32>
    %cst_14 = arith.constant 0.707106769 : f32
    %21 = vector.broadcast %cst_14 : f32 to vector<128x128xf32>
    %22 = arith.mulf %18, %21 : vector<128x128xf32>
    %23 = math.erf %22 : vector<128x128xf32>
    %cst_15 = arith.constant 1.000000e+00 : f32
    %24 = vector.broadcast %cst_15 : f32 to vector<128x128xf32>
    %25 = arith.addf %24, %23 : vector<128x128xf32>
    %26 = arith.mulf %20, %25 : vector<128x128xf32>
    %c0_16 = arith.constant 0 : index
    %c0_17 = arith.constant 0 : index
    %27 = vector.load %arg6[%c0_16, %c0_17] : memref<128x128xf32, #tpu.memory_space<vmem>>, vector<128x128xf32>
    %cst_18 = arith.constant dense<0.000000e+00> : vector<128x128xf32>
    %28 = tpu.matmul %26, %27, %cst_18 {dimension_numbers = #tpu.dot_dimension_numbers<[1], [0], [0], [1], [0, 0, 1, 1], [], []>} : vector<128x128xf32>, vector<128x128xf32>, vector<128x128xf32> -> vector<128x128xf32>
    %c0_19 = arith.constant 0 : index
    %c0_20 = arith.constant 0 : index
    %29 = vector.load %arg7[%c0_19, %c0_20] : memref<1x128xf32, #tpu.memory_space<vmem>>, vector<1x128xf32>
    %30 = vector.broadcast %29 : vector<1x128xf32> to vector<128x128xf32>
    %31 = arith.addf %28, %30 : vector<128x128xf32>
    %c0_21 = arith.constant 0 : index
    %c0_22 = arith.constant 0 : index
    %32 = vector.load %arg8[%c0_21, %c0_22] : memref<128x128xf32, #tpu.memory_space<vmem>>, vector<128x128xf32>
    tpu.vector_store %arg8[%c0_21, %c0_22], %31 {strides = array<i32>} : memref<128x128xf32, #tpu.memory_space<vmem>>, vector<128x128xf32>,
    return
  }
  func.func @transform_0(%arg0: i32) -> (i32, i32) {
    %c0_i32 = arith.constant 0 : i32
    %c0_i32_0 = arith.constant 0 : i32
    return %arg0, %c0_i32 : i32, i32
  }
  func.func @transform_1(%arg0: i32) -> (i32, i32) {
    %c0_i32 = arith.constant 0 : i32
    %c0_i32_0 = arith.constant 0 : i32
    %c0_i32_1 = arith.constant 0 : i32
    return %c0_i32, %c0_i32_0 : i32, i32
  }
  func.func @transform_2(%arg0: i32) -> (i32, i32) {
    %c0_i32 = arith.constant 0 : i32
    %c0_i32_0 = arith.constant 0 : i32
    %c0_i32_1 = arith.constant 0 : i32
    return %c0_i32, %c0_i32_0 : i32, i32
  }
  func.func @transform_3(%arg0: i32) -> (i32, i32) {
    %c0_i32 = arith.constant 0 : i32
    %c0_i32_0 = arith.constant 0 : i32
    %c0_i32_1 = arith.constant 0 : i32
    return %c0_i32, %c0_i32_0 : i32, i32
  }
  func.func @transform_4(%arg0: i32) -> (i32, i32) {
    %c0_i32 = arith.constant 0 : i32
    %c0_i32_0 = arith.constant 0 : i32
    %c0_i32_1 = arith.constant 0 : i32
    return %c0_i32, %c0_i32_0 : i32, i32
  }
  func.func @transform_5(%arg0: i32) -> (i32, i32) {
    %c0_i32 = arith.constant 0 : i32
    %c0_i32_0 = arith.constant 0 : i32
    %c0_i32_1 = arith.constant 0 : i32
    return %c0_i32, %c0_i32_0 : i32, i32
  }
  func.func @transform_6(%arg0: i32) -> (i32, i32) {
    %c0_i32 = arith.constant 0 : i32
    %c0_i32_0 = arith.constant 0 : i32
    %c0_i32_1 = arith.constant 0 : i32
    return %c0_i32, %c0_i32_0 : i32, i32
  }
  func.func @transform_7(%arg0: i32) -> (i32, i32) {
    %c0_i32 = arith.constant 0 : i32
    %c0_i32_0 = arith.constant 0 : i32
    return %arg0, %c0_i32 : i32, i32
  }
}

</mosaic_0001>

<llo_original>
// kernel: mlp_head.1
$region0: #{mlp_head.1}
  #allocation0 [shape = 'u32[]', space=smem, size = 0x4, offset = 0x4, fixed_abs, tag = 'smem constant byte address 0x4 - core index']
  #allocation1 [shape = 'u32[144,128]{1,0:T(1,128)}', space=vmem, size = 0x12000, scoped, tag = 'internal scratch']
  %s0 = inlined_call_operand.vmem [shape: f32[128,128], index: 0, kind: input, shape index: {}]
  %s1 = inlined_call_operand.vmem [shape: f32[128,128], index: 1, kind: input, shape index: {}]
  %s2 = inlined_call_operand.vmem [shape: f32[1,128], index: 2, kind: input, shape index: {}]
  %s3 = inlined_call_operand.vmem [shape: f32[128,128], index: 3, kind: input, shape index: {}]
  %s4 = inlined_call_operand.vmem [shape: f32[1,128], index: 4, kind: input, shape index: {}]
  %s5 = inlined_call_operand.vmem [shape: f32[128,128], index: 5, kind: input, shape index: {}]
  %s6 = inlined_call_operand.vmem [shape: f32[1,128], index: 6, kind: input, shape index: {}]
  %s7 = inlined_call_operand.vmem [shape: f32[128,128], index: 7, kind: output, shape index: {}]
  %s8 = sld [smem:[#allocation0]]
  $region38: #{mlp_head.1} parent=0
    _
  %s10 = ssub.s32 1, %s8
  %s11 = scalar_select 0, %s10, %s8
  // Predicated region
  $region2: #{mlp_head.1} parent=0 // pred_check
    _
  $region3: #{mlp_head.1} parent=0 // pred_check_branch
    %13 = sbr.rel (0) target = $region5
  $region4: #{mlp_head.1} parent=0 // pred_region
    _
  $region5: #{mlp_head.1} parent=0 // pred_fallthru
    _
  // Predicated region
  $region6: #{mlp_head.1} parent=0 // pred_check
    _
  $region7: #{mlp_head.1} parent=0 // pred_check_branch
    %15 = sbr.rel (0) target = $region9
  $region8: #{mlp_head.1} parent=0 // pred_region
    _
  $region9: #{mlp_head.1} parent=0 // pred_fallthru
    _
  // Predicated region
  $region10: #{mlp_head.1} parent=0 // pred_check
    _
  $region11: #{mlp_head.1} parent=0 // pred_check_branch
    %17 = sbr.rel (0) target = $region13
  $region12: #{mlp_head.1} parent=0 // pred_region
    _
  $region13: #{mlp_head.1} parent=0 // pred_fallthru
    _
  // Predicated region
  $region14: #{mlp_head.1} parent=0 // pred_check
    _
  $region15: #{mlp_head.1} parent=0 // pred_check_branch
    %19 = sbr.rel (0) target = $region17
  $region16: #{mlp_head.1} parent=0 // pred_region
    _
  $region17: #{mlp_head.1} parent=0 // pred_fallthru
    _
  // Predicated region
  $region18: #{mlp_head.1} parent=0 // pred_check
    _
  $region19: #{mlp_head.1} parent=0 // pred_check_branch
    %21 = sbr.rel (0) target = $region21
  $region20: #{mlp_head.1} parent=0 // pred_region
    _
  $region21: #{mlp_head.1} parent=0 // pred_fallthru
    _
  // Predicated region
  $region22: #{mlp_head.1} parent=0 // pred_check
    _
  $region23: #{mlp_head.1} parent=0 // pred_check_branch
    %23 = sbr.rel (0) target = $region25
  $region24: #{mlp_head.1} parent=0 // pred_region
    _
  $region25: #{mlp_head.1} parent=0 // pred_fallthru
    _
  // Predicated region
  $region26: #{mlp_head.1} parent=0 // pred_check
    _
  $region27: #{mlp_head.1} parent=0 // pred_check_branch
    %25 = sbr.rel (0) target = $region29
  $region28: #{mlp_head.1} parent=0 // pred_region
    _
  $region29: #{mlp_head.1} parent=0 // pred_fallthru
    _
  %v26 = vld [vmem:[%s0] sm:$0xff]
  %v27 = vld [vmem:[%s0 + $0x8] sm:$0xff]
  %v28 = vld [vmem:[%s0 + $0x10] sm:$0xff]
  %v29 = vld [vmem:[%s0 + $0x18] sm:$0xff]
  %v30 = vld [vmem:[%s0 + $0x20] sm:$0xff]
  %v31 = vld [vmem:[%s0 + $0x28] sm:$0xff]
  %v32 = vld [vmem:[%s0 + $0x30] sm:$0xff]
  %v33 = vld [vmem:[%s0 + $0x38] sm:$0xff]
  %v34 = vld [vmem:[%s0 + $0x40] sm:$0xff]
  %v35 = vld [vmem:[%s0 + $0x48] sm:$0xff]
  %v36 = vld [vmem:[%s0 + $0x50] sm:$0xff]
  %v37 = vld [vmem:[%s0 + $0x58] sm:$0xff]
  %v38 = vld [vmem:[%s0 + $0x60] sm:$0xff]
  %v39 = vld [vmem:[%s0 + $0x68] sm:$0xff]
  %v40 = vld [vmem:[%s0 + $0x70] sm:$0xff]
  %v41 = vld [vmem:[%s0 + $0x78] sm:$0xff]
  %v42 = vld [vmem:[%s1] sm:$0xff]
  %v43 = vld [vmem:[%s1 + $0x8] sm:$0xff]
  %v44 = vld [vmem:[%s1 + $0x10] sm:$0xff]
  %v45 = vld [vmem:[%s1 + $0x18] sm:$0xff]
  %v46 = vld [vmem:[%s1 + $0x20] sm:$0xff]
  %v47 = vld [vmem:[%s1 + $0x28] sm:$0xff]
  %v48 = vld [vmem:[%s1 + $0x30] sm:$0xff]
  %v49 = vld [vmem:[%s1 + $0x38] sm:$0xff]
  %v50 = vld [vmem:[%s1 + $0x40] sm:$0xff]
  %v51 = vld [vmem:[%s1 + $0x48] sm:$0xff]
  %v52 = vld [vmem:[%s1 + $0x50] sm:$0xff]
  %v53 = vld [vmem:[%s1 + $0x58] sm:$0xff]
  %v54 = vld [vmem:[%s1 + $0x60] sm:$0xff]
  %v55 = vld [vmem:[%s1 + $0x68] sm:$0xff]
  %v56 = vld [vmem:[%s1 + $0x70] sm:$0xff]
  %v57 = vld [vmem:[%s1 + $0x78] sm:$0xff]
  %v58 = vld [vmem:[%s2] sm:$0x1]
  %v60 = vlaneseq
  %v61 = vshrl.u32 %v60, 7
  %v62 = vsub.s32 0, %v61
  %v63 = vrot.slane %v58, %v62
  %65 = vmatprep.subr.mxu0 0.0
  %66 = vmatpush1.msra.mxu0 %v42
  %67 = vmatprep.subr.mxu0 0.0
  %68 = vmatpush1.msra.mxu0 %v43
  %69 = vmatprep.subr.mxu0 0.0
  %70 = vmatpush1.msra.mxu0 %v44
  %71 = vmatprep.subr.mxu0 0.0
  %72 = vmatpush1.msra.mxu0 %v45
  %73 = vmatprep.subr.mxu0 0.0
  %74 = vmatpush1.msra.mxu0 %v46
  %75 = vmatprep.subr.mxu0 0.0
  %76 = vmatpush1.msra.mxu0 %v47
  %77 = vmatprep.subr.mxu0 0.0
  %78 = vmatpush1.msra.mxu0 %v48
  %79 = vmatprep.subr.mxu0 0.0
  %80 = vmatpush1.msra.mxu0 %v49
  %81 = vmatprep.subr.mxu0 0.0
  %82 = vmatpush1.msra.mxu0 %v50
  %83 = vmatprep.subr.mxu0 0.0
  %84 = vmatpush1.msra.mxu0 %v51
  %85 = vmatprep.subr.mxu0 0.0
  %86 = vmatpush1.msra.mxu0 %v52
  %87 = vmatprep.subr.mxu0 0.0
  %88 = vmatpush1.msra.mxu0 %v53
  %89 = vmatprep.subr.mxu0 0.0
  %90 = vmatpush1.msra.mxu0 %v54
  %91 = vmatprep.subr.mxu0 0.0
  %92 = vmatpush1.msra.mxu0 %v55
  %93 = vmatprep.subr.mxu0 0.0
  %94 = vmatpush1.msra.mxu0 %v56
  %95 = vmatprep.subr.mxu0 0.0
  %96 = vmatpush1.msra.mxu0 %v57
  %97 = vmatprep.subr.mxu0 0.0
  %98 = vmatpush1.msra.mxu0 0.0
  %99 = vmatprep.subr.mxu0 0.0
  %100 = vmatpush1.msra.mxu0 0.0
  %101 = vmatprep.subr.mxu0 0.0
  %102 = vmatpush1.msra.mxu0 0.0
  %103 = vmatprep.subr.mxu0 0.0
  %104 = vmatpush1.msra.mxu0 0.0
  %105 = vmatprep.subr.mxu0 0.0
  %106 = vmatpush1.msra.mxu0 0.0
  %107 = vmatprep.subr.mxu0 0.0
  %108 = vmatpush1.msra.mxu0 0.0
  %109 = vmatprep.subr.mxu0 0.0
  %110 = vmatpush1.msra.mxu0 0.0
  %111 = vmatprep.subr.mxu0 0.0
  %112 = vmatpush1.msra.mxu0 0.0
  %113 = vmatprep.subr.mxu0 0.0
  %114 = vmatpush1.msra.mxu0 0.0
  %115 = vmatprep.subr.mxu0 0.0
  %116 = vmatpush1.msra.mxu0 0.0
  %117 = vmatprep.subr.mxu0 0.0
  %118 = vmatpush1.msra.mxu0 0.0
  %119 = vmatprep.subr.mxu0 0.0
  %120 = vmatpush1.msra.mxu0 0.0
  %121 = vmatprep.subr.mxu0 0.0
  %122 = vmatpush1.msra.mxu0 0.0
  %123 = vmatprep.subr.mxu0 0.0
  %124 = vmatpush1.msra.mxu0 0.0
  %125 = vmatprep.subr.mxu0 0.0
  %126 = vmatpush1.msra.mxu0 0.0
  %127 = vmatprep.subr.mxu0 0.0
  %128 = vmatpush1.msra.mxu0 0.0
  %129 = vmatprep.mubr.f32.mxu0 0.0
  %130 = vmatmul.mubr.f32.gmra.mrb[0].mxu0 %v26
  %v131 = vpop.f32.mrb[0].mxu0
  %v132 = vadd.f32 %v63, %v131
  %v133 = vpop.f32.mrb[0].mxu0
  %134 = vmatprep.mubr.f32.mxu0 0.0
  %135 = vmatmul.mubr.f32.gmra.mrb[0].mxu0 %v27
  %v136 = vpop.f32.mrb[0].mxu0
  %v137 = vadd.f32 %v63, %v136
  %v138 = vpop.f32.mrb[0].mxu0
  %139 = vmatprep.mubr.f32.mxu0 0.0
  %140 = vmatmul.mubr.f32.gmra.mrb[0].mxu0 %v28
  %v141 = vpop.f32.mrb[0].mxu0
  %v142 = vadd.f32 %v63, %v141
  %v143 = vpop.f32.mrb[0].mxu0
  %144 = vmatprep.mubr.f32.mxu0 0.0
  %145 = vmatmul.mubr.f32.gmra.mrb[0].mxu0 %v29
  %v146 = vpop.f32.mrb[0].mxu0
  %v147 = vadd.f32 %v63, %v146
  %v148 = vpop.f32.mrb[0].mxu0
  %149 = vmatprep.mubr.f32.mxu0 0.0
  %150 = vmatmul.mubr.f32.gmra.mrb[0].mxu0 %v30
  %v151 = vpop.f32.mrb[0].mxu0
  %v152 = vadd.f32 %v63, %v151
  %v153 = vpop.f32.mrb[0].mxu0
  %154 = vmatprep.mubr.f32.mxu0 0.0
  %155 = vmatmul.mubr.f32.gmra.mrb[0].mxu0 %v31
  %v156 = vpop.f32.mrb[0].mxu0
  %v157 = vadd.f32 %v63, %v156
  %v158 = vpop.f32.mrb[0].mxu0
  %159 = vmatprep.mubr.f32.mxu0 0.0
  %160 = vmatmul.mubr.f32.gmra.mrb[0].mxu0 %v32
  %v161 = vpop.f32.mrb[0].mxu0
  %v162 = vadd.f32 %v63, %v161
  %v163 = vpop.f32.mrb[0].mxu0
  %164 = vmatprep.mubr.f32.mxu0 0.0
  %165 = vmatmul.mubr.f32.gmra.mrb[0].mxu0 %v33
  %v166 = vpop.f32.mrb[0].mxu0
  %v167 = vadd.f32 %v63, %v166
  %v168 = vpop.f32.mrb[0].mxu0
  %169 = vmatprep.mubr.f32.mxu0 0.0
  %170 = vmatmul.mubr.f32.gmra.mrb[0].mxu0 %v34
  %v171 = vpop.f32.mrb[0].mxu0
  %v172 = vadd.f32 %v63, %v171
  %v173 = vpop.f32.mrb[0].mxu0
  %174 = vmatprep.mubr.f32.mxu0 0.0
  %175 = vmatmul.mubr.f32.gmra.mrb[0].mxu0 %v35
  %v176 = vpop.f32.mrb[0].mxu0
  %v177 = vadd.f32 %v63, %v176
  %v178 = vpop.f32.mrb[0].mxu0
  %179 = vmatprep.mubr.f32.mxu0 0.0
  %180 = vmatmul.mubr.f32.gmra.mrb[0].mxu0 %v36
  %v181 = vpop.f32.mrb[0].mxu0
  %v182 = vadd.f32 %v63, %v181
  %v183 = vpop.f32.mrb[0].mxu0
  %184 = vmatprep.mubr.f32.mxu0 0.0
  %185 = vmatmul.mubr.f32.gmra.mrb[0].mxu0 %v37
  %v186 = vpop.f32.mrb[0].mxu0
  %v187 = vadd.f32 %v63, %v186
  %v188 = vpop.f32.mrb[0].mxu0
  %189 = vmatprep.mubr.f32.mxu0 0.0
  %190 = vmatmul.mubr.f32.gmra.mrb[0].mxu0 %v38
  %v191 = vpop.f32.mrb[0].mxu0
  %v192 = vadd.f32 %v63, %v191
  %v193 = vpop.f32.mrb[0].mxu0
  %194 = vmatprep.mubr.f32.mxu0 0.0
  %195 = vmatmul.mubr.f32.gmra.mrb[0].mxu0 %v39
  %v196 = vpop.f32.mrb[0].mxu0
  %v197 = vadd.f32 %v63, %v196
  %v198 = vpop.f32.mrb[0].mxu0
  %199 = vmatprep.mubr.f32.mxu0 0.0
  %200 = vmatmul.mubr.f32.gmra.mrb[0].mxu0 %v40
  %v201 = vpop.f32.mrb[0].mxu0
  %v202 = vadd.f32 %v63, %v201
  %v203 = vpop.f32.mrb[0].mxu0
  %204 = vmatprep.mubr.f32.mxu0 0.0
  %205 = vmatmul.mubr.f32.gmra.mrb[0].mxu0 %v41
  %v206 = vpop.f32.mrb[0].mxu0
  %v207 = vadd.f32 %v63, %v206
  %v208 = vpop.f32.mrb[0].mxu0
  %209 = vdwg.mxu0
  %v210 = vmul.f32 %v132, 0.5
  %v211 = vmul.f32 %v137, 0.5
  %v212 = vmul.f32 %v142, 0.5
  %v213 = vmul.f32 %v147, 0.5
  %v214 = vmul.f32 %v152, 0.5
  %v215 = vmul.f32 %v157, 0.5
  %v216 = vmul.f32 %v162, 0.5
  %v217 = vmul.f32 %v167, 0.5
  %v218 = vmul.f32 %v172, 0.5
  %v219 = vmul.f32 %v177, 0.5
  %v220 = vmul.f32 %v182, 0.5
  %v221 = vmul.f32 %v187, 0.5
  %v222 = vmul.f32 %v192, 0.5
  %v223 = vmul.f32 %v197, 0.5
  %v224 = vmul.f32 %v202, 0.5
  %v225 = vmul.f32 %v207, 0.5
  %v226 = vmul.f32 %v132, 0.70710677
  %v227 = vmul.f32 %v137, 0.70710677
  %v228 = vmul.f32 %v142, 0.70710677
  %v229 = vmul.f32 %v147, 0.70710677
  %v230 = vmul.f32 %v152, 0.70710677
  %v231 = vmul.f32 %v157, 0.70710677
  %v232 = vmul.f32 %v162, 0.70710677
  %v233 = vmul.f32 %v167, 0.70710677
  %v234 = vmul.f32 %v172, 0.70710677
  %v235 = vmul.f32 %v177, 0.70710677
  %v236 = vmul.f32 %v182, 0.70710677
  %v237 = vmul.f32 %v187, 0.70710677
  %v238 = vmul.f32 %v192, 0.70710677
  %v239 = vmul.f32 %v197, 0.70710677
  %v240 = vmul.f32 %v202, 0.70710677
  %v241 = vmul.f32 %v207, 0.70710677
  %v242 = verf.f32.pop %v226
  %v243 = verf.f32.pop %v227
  %v244 = verf.f32.pop %v228
  %v245 = verf.f32.pop %v229
  %v246 = verf.f32.pop %v230
  %v247 = verf.f32.pop %v231
  %v248 = verf.f32.pop %v232
  %v249 = verf.f32.pop %v233
  %v250 = verf.f32.pop %v234
  %v251 = verf.f32.pop %v235
  %v252 = verf.f32.pop %v236
  %v253 = verf.f32.pop %v237
  %v254 = verf.f32.pop %v238
  %v255 = verf.f32.pop %v239
  %v256 = verf.f32.pop %v240
  %v257 = verf.f32.pop %v241
  %v258 = vadd.f32 %v242, 1.0
  %v259 = vadd.f32 %v243, 1.0
  %v260 = vadd.f32 %v244, 1.0
  %v261 = vadd.f32 %v245, 1.0
  %v262 = vadd.f32 %v246, 1.0
  %v263 = vadd.f32 %v247, 1.0
  %v264 = vadd.f32 %v248, 1.0
  %v265 = vadd.f32 %v249, 1.0
  %v266 = vadd.f32 %v250, 1.0
  %v267 = vadd.f32 %v251, 1.0
  %v268 = vadd.f32 %v252, 1.0
  %v269 = vadd.f32 %v253, 1.0
  %v270 = vadd.f32 %v254, 1.0
  %v271 = vadd.f32 %v255, 1.0
  %v272 = vadd.f32 %v256, 1.0
  %v273 = vadd.f32 %v257, 1.0
  %v274 = vmul.f32 %v210, %v258
  %v275 = vmul.f32 %v211, %v259
  %v276 = vmul.f32 %v212, %v260
  %v277 = vmul.f32 %v213, %v261
  %v278 = vmul.f32 %v214, %v262
  %v279 = vmul.f32 %v215, %v263
  %v280 = vmul.f32 %v216, %v264
  %v281 = vmul.f32 %v217, %v265
  %v282 = vmul.f32 %v218, %v266
  %v283 = vmul.f32 %v219, %v267
  %v284 = vmul.f32 %v220, %v268
  %v285 = vmul.f32 %v221, %v269
  %v286 = vmul.f32 %v222, %v270
  %v287 = vmul.f32 %v223, %v271
  %v288 = vmul.f32 %v224, %v272
  %v289 = vmul.f32 %v225, %v273
  %v290 = vld [vmem:[%s3] sm:$0xff]
  %v291 = vld [vmem:[%s3 + $0x8] sm:$0xff]
  %v292 = vld [vmem:[%s3 + $0x10] sm:$0xff]
  %v293 = vld [vmem:[%s3 + $0x18] sm:$0xff]
  %v294 = vld [vmem:[%s3 + $0x20] sm:$0xff]
  %v295 = vld [vmem:[%s3 + $0x28] sm:$0xff]
  %v296 = vld [vmem:[%s3 + $0x30] sm:$0xff]
  %v297 = vld [vmem:[%s3 + $0x38] sm:$0xff]
  %v298 = vld [vmem:[%s3 + $0x40] sm:$0xff]
  %v299 = vld [vmem:[%s3 + $0x48] sm:$0xff]
  %v300 = vld [vmem:[%s3 + $0x50] sm:$0xff]
  %v301 = vld [vmem:[%s3 + $0x58] sm:$0xff]
  %v302 = vld [vmem:[%s3 + $0x60] sm:$0xff]
  %v303 = vld [vmem:[%s3 + $0x68] sm:$0xff]
  %v304 = vld [vmem:[%s3 + $0x70] sm:$0xff]
  %v305 = vld [vmem:[%s3 + $0x78] sm:$0xff]
  %v306 = vld [vmem:[%s4] sm:$0x1]
  %v308 = vlaneseq
  %v309 = vshrl.u32 %v308, 7
  %v310 = vsub.s32 0, %v309
  %v311 = vrot.slane %v306, %v310
  %313 = vmatprep.subr.mxu0 0.0
  %314 = vmatpush1.msra.mxu0 %v290
  %315 = vmatprep.subr.mxu0 0.0
  %316 = vmatpush1.msra.mxu0 %v291
  %317 = vmatprep.subr.mxu0 0.0
  %318 = vmatpush1.msra.mxu0 %v292
  %319 = vmatprep.subr.mxu0 0.0
  %320 = vmatpush1.msra.mxu0 %v293
  %321 = vmatprep.subr.mxu0 0.0
  %322 = vmatpush1.msra.mxu0 %v294
  %323 = vmatprep.subr.mxu0 0.0
  %324 = vmatpush1.msra.mxu0 %v295
  %325 = vmatprep.subr.mxu0 0.0
  %326 = vmatpush1.msra.mxu0 %v296
  %327 = vmatprep.subr.mxu0 0.0
  %328 = vmatpush1.msra.mxu0 %v297
  %329 = vmatprep.subr.mxu0 0.0
  %330 = vmatpush1.msra.mxu0 %v298
  %331 = vmatprep.subr.mxu0 0.0
  %332 = vmatpush1.msra.mxu0 %v299
  %333 = vmatprep.subr.mxu0 0.0
  %334 = vmatpush1.msra.mxu0 %v300
  %335 = vmatprep.subr.mxu0 0.0
  %336 = vmatpush1.msra.mxu0 %v301
  %337 = vmatprep.subr.mxu0 0.0
  %338 = vmatpush1.msra.mxu0 %v302
  %339 = vmatprep.subr.mxu0 0.0
  %340 = vmatpush1.msra.mxu0 %v303
  %341 = vmatprep.subr.mxu0 0.0
  %342 = vmatpush1.msra.mxu0 %v304
  %343 = vmatprep.subr.mxu0 0.0
  %344 = vmatpush1.msra.mxu0 %v305
  %345 = vmatprep.subr.mxu0 0.0
  %346 = vmatpush1.msra.mxu0 0.0
  %347 = vmatprep.subr.mxu0 0.0
  %348 = vmatpush1.msra.mxu0 0.0
  %349 = vmatprep.subr.mxu0 0.0
  %350 = vmatpush1.msra.mxu0 0.0
  %351 = vmatprep.subr.mxu0 0.0
  %352 = vmatpush1.msra.mxu0 0.0
  %353 = vmatprep.subr.mxu0 0.0
  %354 = vmatpush1.msra.mxu0 0.0
  %355 = vmatprep.subr.mxu0 0.0
  %356 = vmatpush1.msra.mxu0 0.0
  %357 = vmatprep.subr.mxu0 0.0
  %358 = vmatpush1.msra.mxu0 0.0
  %359 = vmatprep.subr.mxu0 0.0
  %360 = vmatpush1.msra.mxu0 0.0
  %361 = vmatprep.subr.mxu0 0.0
  %362 = vmatpush1.msra.mxu0 0.0
  %363 = vmatprep.subr.mxu0 0.0
  %364 = vmatpush1.msra.mxu0 0.0
  %365 = vmatprep.subr.mxu0 0.0
  %366 = vmatpush1.msra.mxu0 0.0
  %367 = vmatprep.subr.mxu0 0.0
  %368 = vmatpush1.msra.mxu0 0.0
  %369 = vmatprep.subr.mxu0 0.0
  %370 = vmatpush1.msra.mxu0 0.0
  %371 = vmatprep.subr.mxu0 0.0
  %372 = vmatpush1.msra.mxu0 0.0
  %373 = vmatprep.subr.mxu0 0.0
  %374 = vmatpush1.msra.mxu0 0.0
  %375 = vmatprep.subr.mxu0 0.0
  %376 = vmatpush1.msra.mxu0 0.0
  %377 = vmatprep.mubr.f32.mxu0 0.0
  %378 = vmatmul.mubr.f32.gmra.mrb[0].mxu0 %v274
  %v379 = vpop.f32.mrb[0].mxu0
  %v380 = vadd.f32 %v311, %v379
  %v381 = vpop.f32.mrb[0].mxu0
  %382 = vmatprep.mubr.f32.mxu0 0.0
  %383 = vmatmul.mubr.f32.gmra.mrb[0].mxu0 %v275
  %v384 = vpop.f32.mrb[0].mxu0
  %v385 = vadd.f32 %v311, %v384
  %v386 = vpop.f32.mrb[0].mxu0
  %387 = vmatprep.mubr.f32.mxu0 0.0
  %388 = vmatmul.mubr.f32.gmra.mrb[0].mxu0 %v276
  %v389 = vpop.f32.mrb[0].mxu0
  %v390 = vadd.f32 %v311, %v389
  %v391 = vpop.f32.mrb[0].mxu0
  %392 = vmatprep.mubr.f32.mxu0 0.0
  %393 = vmatmul.mubr.f32.gmra.mrb[0].mxu0 %v277
  %v394 = vpop.f32.mrb[0].mxu0
  %v395 = vadd.f32 %v311, %v394
  %v396 = vpop.f32.mrb[0].mxu0
  %397 = vmatprep.mubr.f32.mxu0 0.0
  %398 = vmatmul.mubr.f32.gmra.mrb[0].mxu0 %v278
  %v399 = vpop.f32.mrb[0].mxu0
  %v400 = vadd.f32 %v311, %v399
  %v401 = vpop.f32.mrb[0].mxu0
  %402 = vmatprep.mubr.f32.mxu0 0.0
  %403 = vmatmul.mubr.f32.gmra.mrb[0].mxu0 %v279
  %v404 = vpop.f32.mrb[0].mxu0
  %v405 = vadd.f32 %v311, %v404
  %v406 = vpop.f32.mrb[0].mxu0
  %407 = vmatprep.mubr.f32.mxu0 0.0
  %408 = vmatmul.mubr.f32.gmra.mrb[0].mxu0 %v280
  %v409 = vpop.f32.mrb[0].mxu0
  %v410 = vadd.f32 %v311, %v409
  %v411 = vpop.f32.mrb[0].mxu0
  %412 = vmatprep.mubr.f32.mxu0 0.0
  %413 = vmatmul.mubr.f32.gmra.mrb[0].mxu0 %v281
  %v414 = vpop.f32.mrb[0].mxu0
  %v415 = vadd.f32 %v311, %v414
  %v416 = vpop.f32.mrb[0].mxu0
  %417 = vmatprep.mubr.f32.mxu0 0.0
  %418 = vmatmul.mubr.f32.gmra.mrb[0].mxu0 %v282
  %v419 = vpop.f32.mrb[0].mxu0
  %v420 = vadd.f32 %v311, %v419
  %v421 = vpop.f32.mrb[0].mxu0
  %422 = vmatprep.mubr.f32.mxu0 0.0
  %423 = vmatmul.mubr.f32.gmra.mrb[0].mxu0 %v283
  %v424 = vpop.f32.mrb[0].mxu0
  %v425 = vadd.f32 %v311, %v424
  %v426 = vpop.f32.mrb[0].mxu0
  %427 = vmatprep.mubr.f32.mxu0 0.0
  %428 = vmatmul.mubr.f32.gmra.mrb[0].mxu0 %v284
  %v429 = vpop.f32.mrb[0].mxu0
  %v430 = vadd.f32 %v311, %v429
  %v431 = vpop.f32.mrb[0].mxu0
  %432 = vmatprep.mubr.f32.mxu0 0.0
  %433 = vmatmul.mubr.f32.gmra.mrb[0].mxu0 %v285
  %v434 = vpop.f32.mrb[0].mxu0
  %v435 = vadd.f32 %v311, %v434
  %v436 = vpop.f32.mrb[0].mxu0
  %437 = vmatprep.mubr.f32.mxu0 0.0
  %438 = vmatmul.mubr.f32.gmra.mrb[0].mxu0 %v286
  %v439 = vpop.f32.mrb[0].mxu0
  %v440 = vadd.f32 %v311, %v439
  %v441 = vpop.f32.mrb[0].mxu0
  %442 = vmatprep.mubr.f32.mxu0 0.0
  %443 = vmatmul.mubr.f32.gmra.mrb[0].mxu0 %v287
  %v444 = vpop.f32.mrb[0].mxu0
  %v445 = vadd.f32 %v311, %v444
  %v446 = vpop.f32.mrb[0].mxu0
  %447 = vmatprep.mubr.f32.mxu0 0.0
  %448 = vmatmul.mubr.f32.gmra.mrb[0].mxu0 %v288
  %v449 = vpop.f32.mrb[0].mxu0
  %v450 = vadd.f32 %v311, %v449
  %v451 = vpop.f32.mrb[0].mxu0
  %452 = vmatprep.mubr.f32.mxu0 0.0
  %453 = vmatmul.mubr.f32.gmra.mrb[0].mxu0 %v289
  %v454 = vpop.f32.mrb[0].mxu0
  %v455 = vadd.f32 %v311, %v454
  %v456 = vpop.f32.mrb[0].mxu0
  %457 = vdwg.mxu0
  %v458 = vmul.f32 %v380, 0.5
  %v459 = vmul.f32 %v385, 0.5
  %v460 = vmul.f32 %v390, 0.5
  %v461 = vmul.f32 %v395, 0.5
  %v462 = vmul.f32 %v400, 0.5
  %v463 = vmul.f32 %v405, 0.5
  %v464 = vmul.f32 %v410, 0.5
  %v465 = vmul.f32 %v415, 0.5
  %v466 = vmul.f32 %v420, 0.5
  %v467 = vmul.f32 %v425, 0.5
  %v468 = vmul.f32 %v430, 0.5
  %v469 = vmul.f32 %v435, 0.5
  %v470 = vmul.f32 %v440, 0.5
  %v471 = vmul.f32 %v445, 0.5
  %v472 = vmul.f32 %v450, 0.5
  %v473 = vmul.f32 %v455, 0.5
  %v474 = vmul.f32 %v380, 0.70710677
  %v475 = vmul.f32 %v385, 0.70710677
  %v476 = vmul.f32 %v390, 0.70710677
  %v477 = vmul.f32 %v395, 0.70710677
  %v478 = vmul.f32 %v400, 0.70710677
  %v479 = vmul.f32 %v405, 0.70710677
  %v480 = vmul.f32 %v410, 0.70710677
  %v481 = vmul.f32 %v415, 0.70710677
  %v482 = vmul.f32 %v420, 0.70710677
  %v483 = vmul.f32 %v425, 0.70710677
  %v484 = vmul.f32 %v430, 0.70710677
  %v485 = vmul.f32 %v435, 0.70710677
  %v486 = vmul.f32 %v440, 0.70710677
  %v487 = vmul.f32 %v445, 0.70710677
  %v488 = vmul.f32 %v450, 0.70710677
  %v489 = vmul.f32 %v455, 0.70710677
  %v490 = verf.f32.pop %v474
  %v491 = verf.f32.pop %v475
  %v492 = verf.f32.pop %v476
  %v493 = verf.f32.pop %v477
  %v494 = verf.f32.pop %v478
  %v495 = verf.f32.pop %v479
  %v496 = verf.f32.pop %v480
  %v497 = verf.f32.pop %v481
  %v498 = verf.f32.pop %v482
  %v499 = verf.f32.pop %v483
  %v500 = verf.f32.pop %v484
  %v501 = verf.f32.pop %v485
  %v502 = verf.f32.pop %v486
  %v503 = verf.f32.pop %v487
  %v504 = verf.f32.pop %v488
  %v505 = verf.f32.pop %v489
  %v506 = vadd.f32 %v490, 1.0
  %v507 = vadd.f32 %v491, 1.0
  %v508 = vadd.f32 %v492, 1.0
  %v509 = vadd.f32 %v493, 1.0
  %v510 = vadd.f32 %v494, 1.0
  %v511 = vadd.f32 %v495, 1.0
  %v512 = vadd.f32 %v496, 1.0
  %v513 = vadd.f32 %v497, 1.0
  %v514 = vadd.f32 %v498, 1.0
  %v515 = vadd.f32 %v499, 1.0
  %v516 = vadd.f32 %v500, 1.0
  %v517 = vadd.f32 %v501, 1.0
  %v518 = vadd.f32 %v502, 1.0
  %v519 = vadd.f32 %v503, 1.0
  %v520 = vadd.f32 %v504, 1.0
  %v521 = vadd.f32 %v505, 1.0
  %v522 = vmul.f32 %v458, %v506
  %v523 = vmul.f32 %v459, %v507
  %v524 = vmul.f32 %v460, %v508
  %v525 = vmul.f32 %v461, %v509
  %v526 = vmul.f32 %v462, %v510
  %v527 = vmul.f32 %v463, %v511
  %v528 = vmul.f32 %v464, %v512
  %v529 = vmul.f32 %v465, %v513
  %v530 = vmul.f32 %v466, %v514
  %v531 = vmul.f32 %v467, %v515
  %v532 = vmul.f32 %v468, %v516
  %v533 = vmul.f32 %v469, %v517
  %v534 = vmul.f32 %v470, %v518
  %v535 = vmul.f32 %v471, %v519
  %v536 = vmul.f32 %v472, %v520
  %v537 = vmul.f32 %v473, %v521
  %v538 = vld [vmem:[%s5] sm:$0xff]
  %v539 = vld [vmem:[%s5 + $0x8] sm:$0xff]
  %v540 = vld [vmem:[%s5 + $0x10] sm:$0xff]
  %v541 = vld [vmem:[%s5 + $0x18] sm:$0xff]
  %v542 = vld [vmem:[%s5 + $0x20] sm:$0xff]
  %v543 = vld [vmem:[%s5 + $0x28] sm:$0xff]
  %v544 = vld [vmem:[%s5 + $0x30] sm:$0xff]
  %v545 = vld [vmem:[%s5 + $0x38] sm:$0xff]
  %v546 = vld [vmem:[%s5 + $0x40] sm:$0xff]
  %v547 = vld [vmem:[%s5 + $0x48] sm:$0xff]
  %v548 = vld [vmem:[%s5 + $0x50] sm:$0xff]
  %v549 = vld [vmem:[%s5 + $0x58] sm:$0xff]
  %v550 = vld [vmem:[%s5 + $0x60] sm:$0xff]
  %v551 = vld [vmem:[%s5 + $0x68] sm:$0xff]
  %v552 = vld [vmem:[%s5 + $0x70] sm:$0xff]
  %v553 = vld [vmem:[%s5 + $0x78] sm:$0xff]
  %v554 = vld [vmem:[%s6] sm:$0x1]
  %v556 = vlaneseq
  %v557 = vshrl.u32 %v556, 7
  %v558 = vsub.s32 0, %v557
  %v559 = vrot.slane %v554, %v558
  %561 = vmatprep.subr.mxu0 0.0
  %562 = vmatpush1.msra.mxu0 %v538
  %563 = vmatprep.subr.mxu0 0.0
  %564 = vmatpush1.msra.mxu0 %v539
  %565 = vmatprep.subr.mxu0 0.0
  %566 = vmatpush1.msra.mxu0 %v540
  %567 = vmatprep.subr.mxu0 0.0
  %568 = vmatpush1.msra.mxu0 %v541
  %569 = vmatprep.subr.mxu0 0.0
  %570 = vmatpush1.msra.mxu0 %v542
  %571 = vmatprep.subr.mxu0 0.0
  %572 = vmatpush1.msra.mxu0 %v543
  %573 = vmatprep.subr.mxu0 0.0
  %574 = vmatpush1.msra.mxu0 %v544
  %575 = vmatprep.subr.mxu0 0.0
  %576 = vmatpush1.msra.mxu0 %v545
  %577 = vmatprep.subr.mxu0 0.0
  %578 = vmatpush1.msra.mxu0 %v546
  %579 = vmatprep.subr.mxu0 0.0
  %580 = vmatpush1.msra.mxu0 %v547
  %581 = vmatprep.subr.mxu0 0.0
  %582 = vmatpush1.msra.mxu0 %v548
  %583 = vmatprep.subr.mxu0 0.0
  %584 = vmatpush1.msra.mxu0 %v549
  %585 = vmatprep.subr.mxu0 0.0
  %586 = vmatpush1.msra.mxu0 %v550
  %587 = vmatprep.subr.mxu0 0.0
  %588 = vmatpush1.msra.mxu0 %v551
  %589 = vmatprep.subr.mxu0 0.0
  %590 = vmatpush1.msra.mxu0 %v552
  %591 = vmatprep.subr.mxu0 0.0
  %592 = vmatpush1.msra.mxu0 %v553
  %593 = vmatprep.subr.mxu0 0.0
  %594 = vmatpush1.msra.mxu0 0.0
  %595 = vmatprep.subr.mxu0 0.0
  %596 = vmatpush1.msra.mxu0 0.0
  %597 = vmatprep.subr.mxu0 0.0
  %598 = vmatpush1.msra.mxu0 0.0
  %599 = vmatprep.subr.mxu0 0.0
  %600 = vmatpush1.msra.mxu0 0.0
  %601 = vmatprep.subr.mxu0 0.0
  %602 = vmatpush1.msra.mxu0 0.0
  %603 = vmatprep.subr.mxu0 0.0
  %604 = vmatpush1.msra.mxu0 0.0
  %605 = vmatprep.subr.mxu0 0.0
  %606 = vmatpush1.msra.mxu0 0.0
  %607 = vmatprep.subr.mxu0 0.0
  %608 = vmatpush1.msra.mxu0 0.0
  %609 = vmatprep.subr.mxu0 0.0
  %610 = vmatpush1.msra.mxu0 0.0
  %611 = vmatprep.subr.mxu0 0.0
  %612 = vmatpush1.msra.mxu0 0.0
  %613 = vmatprep.subr.mxu0 0.0
  %614 = vmatpush1.msra.mxu0 0.0
  %615 = vmatprep.subr.mxu0 0.0
  %616 = vmatpush1.msra.mxu0 0.0
  %617 = vmatprep.subr.mxu0 0.0
  %618 = vmatpush1.msra.mxu0 0.0
  %619 = vmatprep.subr.mxu0 0.0
  %620 = vmatpush1.msra.mxu0 0.0
  %621 = vmatprep.subr.mxu0 0.0
  %622 = vmatpush1.msra.mxu0 0.0
  %623 = vmatprep.subr.mxu0 0.0
  %624 = vmatpush1.msra.mxu0 0.0
  %625 = vmatprep.mubr.f32.mxu0 0.0
  %626 = vmatmul.mubr.f32.gmra.mrb[0].mxu0 %v522
  %v627 = vpop.f32.mrb[0].mxu0
  %v628 = vadd.f32 %v559, %v627
  %v629 = vpop.f32.mrb[0].mxu0
  %630 = vmatprep.mubr.f32.mxu0 0.0
  %631 = vmatmul.mubr.f32.gmra.mrb[0].mxu0 %v523
  %v632 = vpop.f32.mrb[0].mxu0
  %v633 = vadd.f32 %v559, %v632
  %v634 = vpop.f32.mrb[0].mxu0
  %635 = vmatprep.mubr.f32.mxu0 0.0
  %636 = vmatmul.mubr.f32.gmra.mrb[0].mxu0 %v524
  %v637 = vpop.f32.mrb[0].mxu0
  %v638 = vadd.f32 %v559, %v637
  %v639 = vpop.f32.mrb[0].mxu0
  %640 = vmatprep.mubr.f32.mxu0 0.0
  %641 = vmatmul.mubr.f32.gmra.mrb[0].mxu0 %v525
  %v642 = vpop.f32.mrb[0].mxu0
  %v643 = vadd.f32 %v559, %v642
  %v644 = vpop.f32.mrb[0].mxu0
  %645 = vmatprep.mubr.f32.mxu0 0.0
  %646 = vmatmul.mubr.f32.gmra.mrb[0].mxu0 %v526
  %v647 = vpop.f32.mrb[0].mxu0
  %v648 = vadd.f32 %v559, %v647
  %v649 = vpop.f32.mrb[0].mxu0
  %650 = vmatprep.mubr.f32.mxu0 0.0
  %651 = vmatmul.mubr.f32.gmra.mrb[0].mxu0 %v527
  %v652 = vpop.f32.mrb[0].mxu0
  %v653 = vadd.f32 %v559, %v652
  %v654 = vpop.f32.mrb[0].mxu0
  %655 = vmatprep.mubr.f32.mxu0 0.0
  %656 = vmatmul.mubr.f32.gmra.mrb[0].mxu0 %v528
  %v657 = vpop.f32.mrb[0].mxu0
  %v658 = vadd.f32 %v559, %v657
  %v659 = vpop.f32.mrb[0].mxu0
  %660 = vmatprep.mubr.f32.mxu0 0.0
  %661 = vmatmul.mubr.f32.gmra.mrb[0].mxu0 %v529
  %v662 = vpop.f32.mrb[0].mxu0
  %v663 = vadd.f32 %v559, %v662
  %v664 = vpop.f32.mrb[0].mxu0
  %665 = vmatprep.mubr.f32.mxu0 0.0
  %666 = vmatmul.mubr.f32.gmra.mrb[0].mxu0 %v530
  %v667 = vpop.f32.mrb[0].mxu0
  %v668 = vadd.f32 %v559, %v667
  %v669 = vpop.f32.mrb[0].mxu0
  %670 = vmatprep.mubr.f32.mxu0 0.0
  %671 = vmatmul.mubr.f32.gmra.mrb[0].mxu0 %v531
  %v672 = vpop.f32.mrb[0].mxu0
  %v673 = vadd.f32 %v559, %v672
  %v674 = vpop.f32.mrb[0].mxu0
  %675 = vmatprep.mubr.f32.mxu0 0.0
  %676 = vmatmul.mubr.f32.gmra.mrb[0].mxu0 %v532
  %v677 = vpop.f32.mrb[0].mxu0
  %v678 = vadd.f32 %v559, %v677
  %v679 = vpop.f32.mrb[0].mxu0
  %680 = vmatprep.mubr.f32.mxu0 0.0
  %681 = vmatmul.mubr.f32.gmra.mrb[0].mxu0 %v533
  %v682 = vpop.f32.mrb[0].mxu0
  %v683 = vadd.f32 %v559, %v682
  %v684 = vpop.f32.mrb[0].mxu0
  %685 = vmatprep.mubr.f32.mxu0 0.0
  %686 = vmatmul.mubr.f32.gmra.mrb[0].mxu0 %v534
  %v687 = vpop.f32.mrb[0].mxu0
  %v688 = vadd.f32 %v559, %v687
  %v689 = vpop.f32.mrb[0].mxu0
  %690 = vmatprep.mubr.f32.mxu0 0.0
  %691 = vmatmul.mubr.f32.gmra.mrb[0].mxu0 %v535
  %v692 = vpop.f32.mrb[0].mxu0
  %v693 = vadd.f32 %v559, %v692
  %v694 = vpop.f32.mrb[0].mxu0
  %695 = vmatprep.mubr.f32.mxu0 0.0
  %696 = vmatmul.mubr.f32.gmra.mrb[0].mxu0 %v536
  %v697 = vpop.f32.mrb[0].mxu0
  %v698 = vadd.f32 %v559, %v697
  %v699 = vpop.f32.mrb[0].mxu0
  %700 = vmatprep.mubr.f32.mxu0 0.0
  %701 = vmatmul.mubr.f32.gmra.mrb[0].mxu0 %v537
  %v702 = vpop.f32.mrb[0].mxu0
  %v703 = vadd.f32 %v559, %v702
  %v704 = vpop.f32.mrb[0].mxu0
  %705 = vdwg.mxu0
  %706 = vst [vmem:[%s7] sm:$0xff] %v628
  %707 = vst [vmem:[%s7 + $0x8] sm:$0xff] %v633
  %708 = vst [vmem:[%s7 + $0x10] sm:$0xff] %v638
  %709 = vst [vmem:[%s7 + $0x18] sm:$0xff] %v643
  %710 = vst [vmem:[%s7 + $0x20] sm:$0xff] %v648
  %711 = vst [vmem:[%s7 + $0x28] sm:$0xff] %v653
  %712 = vst [vmem:[%s7 + $0x30] sm:$0xff] %v658
  %713 = vst [vmem:[%s7 + $0x38] sm:$0xff] %v663
  %714 = vst [vmem:[%s7 + $0x40] sm:$0xff] %v668
  %715 = vst [vmem:[%s7 + $0x48] sm:$0xff] %v673
  %716 = vst [vmem:[%s7 + $0x50] sm:$0xff] %v678
  %717 = vst [vmem:[%s7 + $0x58] sm:$0xff] %v683
  %718 = vst [vmem:[%s7 + $0x60] sm:$0xff] %v688
  %719 = vst [vmem:[%s7 + $0x68] sm:$0xff] %v693
  %720 = vst [vmem:[%s7 + $0x70] sm:$0xff] %v698
  %721 = vst [vmem:[%s7 + $0x78] sm:$0xff] %v703
  // Predicated region
  $region30: #{mlp_head.1} parent=0 // pred_check
    _
  $region31: #{mlp_head.1} parent=0 // pred_check_branch
    %723 = sbr.rel (0) target = $region33
  $region32: #{mlp_head.1} parent=0 // pred_region
    _
  $region33: #{mlp_head.1} parent=0 // pred_fallthru
    _
  // Predicated region
  $region34: #{mlp_head.1} parent=0 // pred_check
    _
  $region35: #{mlp_head.1} parent=0 // pred_check_branch
    %725 = sbr.rel (0) target = $region37
  $region36: #{mlp_head.1} parent=0 // pred_region
    _
  $region37: #{mlp_head.1} parent=0 // pred_fallthru
    _

</llo_original>
